<compile_context>
chip_gen: v7x
topology: tpu7x:2x2x1
jax: 0.10.0
libtpu: 0.0.40
codegen_flags: <defaults>
</compile_context>

<pallas_src>
import jax
import jax.numpy as jnp
from jax.experimental import pallas as pl
from jax.experimental.pallas import tpu as pltpu

_LANE = 128
_MIN_BLOCK_BYTES = 512 * 1024  # DMA-efficient floor per block


def _symrelu_kernel(x_ref, o_ref):
    x = x_ref[...]
    one = jnp.asarray(1, dtype=x.dtype)  # dtype-matched constants: no upcast
    o_ref[...] = jnp.maximum(-one, jnp.minimum(one, x))


def _packed_sublane(itemsize):
    # Native packed tile heights: (8,128) 4-byte, (16,128) 2-byte, (32,128) 1-byte.
    return {4: 8, 2: 16, 1: 32}.get(itemsize, 8)


def _chip_params():
    """(target_block_bytes, vmem_limit_bytes or None, min_grid_steps) per chip."""
    kind = ""
    try:
        kind = jax.devices()[0].device_kind.lower()
    except Exception:
        pass
    if "v7" in kind:
        # 3.2 TB/s HBM -> bigger blocks; 64 MiB physical VMEM, raise scoped limit.
        return 8 << 20, 48 << 20, 8
    if "v5" in kind:
        # ~0.82 TB/s HBM: per-step overhead already small at 2 MiB blocks.
        return 2 << 20, None, 4
    # v6e (and a safe default for anything unrecognized).
    return 4 << 20, None, 4


def _divisors(n):
    small, large = [], []
    i = 1
    while i * i <= n:
        if n % i == 0:
            small.append(i)
            if i != n // i:
                large.append(n // i)
        i += 1
    return small + large[::-1]


def symrelu(x):
    """Elementwise clamp to [-1, 1] (SymReLU). Any shape / numeric dtype."""
    orig_shape = x.shape
    total = x.size
    if total == 0:
        return x

    itemsize = jnp.dtype(x.dtype).itemsize
    sub = _packed_sublane(itemsize)
    target_block_bytes, vmem_limit, min_steps = _chip_params()

    # Rows of 128 lanes, rounded up to one packed-tile granule (dtype aware).
    rows = -(-total // _LANE)
    rows = -(-rows // sub) * sub
    padded_total = rows * _LANE

    row_bytes = sub * _LANE * itemsize  # bytes per packed-tile row group
    target_d = max(1, target_block_bytes // row_bytes)
    min_d = max(1, _MIN_BLOCK_BYTES // row_bytes)

    n = rows // sub
    cand = [d for d in _divisors(n) if d <= target_d]  # fits per-buffer budget
    # Largest divisor that still leaves enough grid steps for double-buffer
    # overlap, without dropping below the DMA-efficient block floor.
    good = [d for d in cand if n // d >= min_steps and d >= min_d]
    if good:
        d, ragged = max(good), False
    else:
        d, ragged = max(cand), False
        if n > target_d and d < min_d:
            # Awkward factoring (e.g. prime row count): take a full-size block
            # and let Pallas mask the ragged final block instead.
            d, ragged = min(target_d, n), True

    tile_rows = d * sub
    grid = (pl.cdiv(n, d) if ragged else n // d,)

    flat = x.reshape(-1)
    if padded_total != total:
        # At most one (sub x 128) granule of padding; typical NCHW sizes skip this.
        flat = jnp.pad(flat, (0, padded_total - total))
    x2d = flat.reshape(rows, _LANE)

    cp = dict(dimension_semantics=("parallel",))
    if vmem_limit is not None:
        cp["vmem_limit_bytes"] = vmem_limit

    out2d = pl.pallas_call(
        _symrelu_kernel,
        out_shape=jax.ShapeDtypeStruct((rows, _LANE), x.dtype),
        grid_spec=pltpu.PrefetchScalarGridSpec(
            num_scalar_prefetch=0,
            grid=grid,
            in_specs=[pl.BlockSpec((tile_rows, _LANE), lambda i: (i, 0))],
            out_specs=pl.BlockSpec((tile_rows, _LANE), lambda i: (i, 0)),
        ),
        compiler_params=pltpu.CompilerParams(**cp),
    )(x2d)

    out = out2d.reshape(-1)
    if padded_total != total:
        out = out[:total]
    return out.reshape(orig_shape)


if __name__ == "__main__":
    key = jax.random.PRNGKey(0)
    # Small NCHW input consistent with the module: batch=2, channels=4, 16x16.
    x = jax.random.normal(key, (2, 4, 16, 16), dtype=jnp.float32) * 2.0

    y = jax.block_until_ready(symrelu(x))

    # Reference check in plain JAX.
    y_ref = jnp.clip(x, -1.0, 1.0)
    assert y.shape == x.shape
    assert y.dtype == x.dtype
    assert jnp.allclose(y, y_ref), "mismatch vs reference clamp"

    print("KERNEL_OK")
</pallas_src>

<mosaic_0001>
module attributes {stable_mosaic.version = 11 : i64} {
  func.func @_symrelu_kernel(%arg0: i32, %arg1: memref<16x128xf32, #tpu.memory_space<vmem>>, %arg2: memref<16x128xf32, #tpu.memory_space<vmem>>) attributes {dimension_semantics = [#tpu.dimension_semantics<parallel>], iteration_bounds = array<i64: 1>, scalar_prefetch = 0 : i64, scratch_operands = 0 : i64, tpu.core_type = #tpu.core_type<tc>, window_params = [{transform_indices = @transform_0, window_bounds = array<i64: 16, 128>}, {transform_indices = @transform_1, window_bounds = array<i64: 16, 128>}]} {
    %c0 = arith.constant 0 : index
    %c0_0 = arith.constant 0 : index
    %0 = vector.load %arg1[%c0, %c0_0] : memref<16x128xf32, #tpu.memory_space<vmem>>, vector<16x128xf32>
    %cst = arith.constant 0.000000e+00 : f32
    %cst_1 = arith.constant 1.000000e+00 : f32
    %1 = arith.subf %cst, %cst_1 : f32
    %cst_2 = arith.constant 1.000000e+00 : f32
    %2 = vector.broadcast %cst_2 : f32 to vector<16x128xf32>
    %3 = arith.minimumf %2, %0 : vector<16x128xf32>
    %4 = vector.broadcast %1 : f32 to vector<16x128xf32>
    %5 = arith.maximumf %4, %3 : vector<16x128xf32>
    %c0_3 = arith.constant 0 : index
    %c0_4 = arith.constant 0 : index
    %6 = vector.load %arg2[%c0_3, %c0_4] : memref<16x128xf32, #tpu.memory_space<vmem>>, vector<16x128xf32>
    tpu.vector_store %arg2[%c0_3, %c0_4], %5 {strides = array<i32>} : memref<16x128xf32, #tpu.memory_space<vmem>>, vector<16x128xf32>,
    return
  }
  func.func @transform_0(%arg0: i32) -> (i32, i32) {
    %c0_i32 = arith.constant 0 : i32
    %c0_i32_0 = arith.constant 0 : i32
    return %arg0, %c0_i32 : i32, i32
  }
  func.func @transform_1(%arg0: i32) -> (i32, i32) {
    %c0_i32 = arith.constant 0 : i32
    %c0_i32_0 = arith.constant 0 : i32
    return %arg0, %c0_i32 : i32, i32
  }
}

</mosaic_0001>

<llo_original>
// kernel: tpu_custom_call.1
$region0: #{tpu_custom_call.1}
  #allocation0 [shape = 'u32[]', space=smem, size = 0x4, offset = 0x4, fixed_abs, tag = 'smem constant byte address 0x4 - core index']
  #allocation1 [shape = 'u32[144,128]{1,0:T(1,128)}', space=vmem, size = 0x12000, scoped, tag = 'internal scratch']
  %s0 = inlined_call_operand.hbm [shape: f32[16,128], index: 0, kind: input, shape index: {}]
  %s1 = inlined_call_operand.hbm [shape: f32[16,128], index: 1, kind: output, shape index: {}]
  %s2 = sld [smem:[#allocation0]]
  $region18: #{tpu_custom_call.1} parent=0
    _
  %s4 = ssub.s32 1, %s2
  %s5 = scalar_select 0, %s4, %s2
  $region1: #{tpu_custom_call.1} parent=0
    #allocation2 [shape = 'u8[8192]{0}', space=vmem, size = 0x2000, scoped, tag = 'input window, operand 0, single buffered']
    #allocation3 [shape = 's32[1]{0}', space=sflag, size = 0x4, scoped, tag = 'scoped memory for tpu_custom_call.1']
    #allocation4 [shape = 's32[1]{0}', space=sflag, size = 0x4, scoped, tag = 'scoped memory for tpu_custom_call.1']
    #allocation5 [shape = 'u8[8192]{0}', space=vmem, size = 0x2000, scoped, tag = 'output window, operand 0, single buffered']
    %6 = vsyncpa [#allocation3], 0
    %7 = vsyncpa [#allocation4], 0
    // Predicated region
    $region2: #{tpu_custom_call.1} parent=1 // pred_check
      _
    $region3: #{tpu_custom_call.1} parent=1 // pred_check_branch
      %9 = sbr.rel (0) target = $region5
    $region4: #{tpu_custom_call.1} parent=1 // pred_region
      %s11 = ssub.s32 256, 256
      %12 = vsyncadd [#allocation3], %s11
      %s13 = sshll.u32 [#allocation2], 4
      %s14 = int_to_ptr.vmem [resolvable:$true] %s13
      %19 = dma.hbm_to_vmem [thread:$0]  %s0, 256, %s14, [#allocation3], 128, 128, 8
    $region5: #{tpu_custom_call.1} parent=1 // pred_fallthru
      _
    // Predicated region
    $region6: #{tpu_custom_call.1} parent=1 // pred_check
      _
    $region7: #{tpu_custom_call.1} parent=1 // pred_check_branch
      %21 = sbr.rel (0) target = $region9
    $region8: #{tpu_custom_call.1} parent=1 // pred_region
      %22 = dma.done [#allocation3], 256
    $region9: #{tpu_custom_call.1} parent=1 // pred_fallthru
      _
    %v23 = vld [vmem:[#allocation2] sm:$0xff]
    %v24 = vld [vmem:[#allocation2 + $0x8] sm:$0xff]
    %v25 = vmin.f32 %v23, 1.0
    %v26 = vmin.f32 %v24, 1.0
    %v27 = vmax.f32 %v25, -1.0
    %v28 = vmax.f32 %v26, -1.0
    %29 = vst [vmem:[#allocation5] sm:$0xff] %v27
    %30 = vst [vmem:[#allocation5 + $0x8] sm:$0xff] %v28
    // Predicated region
    $region10: #{tpu_custom_call.1} parent=1 // pred_check
      _
    $region11: #{tpu_custom_call.1} parent=1 // pred_check_branch
      %32 = sbr.rel (0) target = $region13
    $region12: #{tpu_custom_call.1} parent=1 // pred_region
      %s34 = ssub.s32 256, 256
      %35 = vsyncadd [#allocation4], %s34
      %s36 = sshll.u32 [#allocation5], 4
      %s37 = int_to_ptr.vmem [resolvable:$true] %s36
      %42 = dma.vmem_to_hbm [thread:$0]  %s37, 256, %s1, [#allocation4], 128, 128, 8
    $region13: #{tpu_custom_call.1} parent=1 // pred_fallthru
      _
    // Predicated region
    $region14: #{tpu_custom_call.1} parent=1 // pred_check
      _
    $region15: #{tpu_custom_call.1} parent=1 // pred_check_branch
      %44 = sbr.rel (0) target = $region17
    $region16: #{tpu_custom_call.1} parent=1 // pred_region
      %45 = dma.done [#allocation4], 256
    $region17: #{tpu_custom_call.1} parent=1 // pred_fallthru
      _
    %46 = vsyncpa [#allocation3], 1
    %47 = vsyncpa [#allocation4], 1

</llo_original>
